<compile_context>
chip_gen: v7x
topology: tpu7x:2x2x1
jax: 0.10.0
libtpu: 0.0.40
codegen_flags: <defaults>
</compile_context>

<pallas_src>
import jax
import jax.numpy as jnp
from jax.experimental import pallas as pl
from jax.experimental.pallas import tpu as pltpu


_SQRT_2_OVER_PI = 0.7978845608028654            # sqrt(2/pi)
_COEF = _SQRT_2_OVER_PI * 0.044715               # folded: sqrt(2/pi)*0.044715

_LANES = 128
# Only split a single-block launch in two when each half still moves >=0.5 MiB
# (f32) so the fixed ~0.35 us per-step overhead stays well hidden.
_MIN_SPLIT_BLOCK_ROWS = 1024


def _gelu_kernel(x_ref, o_ref):
    # Elementwise tanh-GELU on the current VMEM tile (VPU + one EUP tanh).
    x = x_ref[...]
    xf = x.astype(jnp.float32)
    inner = xf * (_SQRT_2_OVER_PI + _COEF * (xf * xf))
    y = 0.5 * xf * (1.0 + jnp.tanh(inner))
    o_ref[...] = y.astype(o_ref.dtype)


def _round_up(x, m):
    return ((x + m - 1) // m) * m


def _vmem_capacity_bytes():
    try:
        return int(pltpu.get_tpu_info().vmem_capacity_bytes)
    except Exception:
        return 64 << 20  # conservative default (v7x per-TC VMEM)


def new_gelu(x):
    """Applies tanh-approximation GELU elementwise (matches NewGELU.forward).

    Floating-point inputs only; bf16 in/out is the cheapest (kernel upcasts to
    f32 internally and casts back on store).
    """
    orig_shape = x.shape
    orig_dtype = x.dtype
    assert jnp.issubdtype(orig_dtype, jnp.floating), "NewGELU expects a float input"
    n = x.size
    if n == 0:
        return x

    itemsize = jnp.dtype(orig_dtype).itemsize
    pack = max(1, 4 // itemsize)      # rows packed per 32-bit sublane word
    pack_rows = 8 * pack              # full-vreg sublane depth for this dtype

    # ---- generation-aware block sizing ------------------------------------
    vmem_cap = _vmem_capacity_bytes()
    if vmem_cap <= (64 << 20):
        # v7x-class: 64 MiB per-TC VMEM, very fast HBM -> ~4 MiB blocks.
        block_bytes = 4 << 20
        vmem_limit = min(vmem_cap * 3 // 4, 48 << 20)
    else:
        # v5e / v6e-class: 128 MiB VMEM -> ~8 MiB blocks.
        block_bytes = 8 << 20
        vmem_limit = 64 << 20
    block_rows_default = max(pack_rows, block_bytes // (_LANES * itemsize))
    block_rows_default = _round_up(block_rows_default, pack_rows)

    # ---- flatten + minimal tail pad ----------------------------------------
    x_flat = jnp.ravel(x)
    pad_to = _LANES * pack            # one packed lane-row, not a whole tile
    n_pad = _round_up(n, pad_to)
    if n_pad != n:
        x_flat = jnp.pad(x_flat, (0, n_pad - n))   # gelu(0) == 0, sliced off below

    rows = n_pad // _LANES
    x2d = x_flat.reshape(rows, _LANES)

    # ---- choose rows-per-block ---------------------------------------------
    if rows <= block_rows_default:
        if rows >= 2 * _MIN_SPLIT_BLOCK_ROWS:
            # Split into 2 steps so v7x's two TensorCores both get work.
            block_rows = _round_up(pl.cdiv(rows, 2), pack_rows)
        else:
            block_rows = rows          # single full-extent block (always legal)
    else:
        block_rows = block_rows_default   # >=2 steps; partial last block is fine

    grid = (pl.cdiv(rows, block_rows),)

    y2d = pl.pallas_call(
        _gelu_kernel,
        out_shape=jax.ShapeDtypeStruct((rows, _LANES), orig_dtype),
        grid=grid,
        in_specs=[pl.BlockSpec((block_rows, _LANES), lambda i: (i, 0))],
        out_specs=pl.BlockSpec((block_rows, _LANES), lambda i: (i, 0)),
        compiler_params=pltpu.CompilerParams(
            dimension_semantics=("parallel",),   # v7x: shard steps across 2 TCs
            vmem_limit_bytes=vmem_limit,
        ),
    )(x2d)

    y_flat = y2d.reshape(-1)
    if n_pad != n:
        y_flat = y_flat[:n]
    return y_flat.reshape(orig_shape)


def _gelu_ref(x):
    xf = x.astype(jnp.float32)
    return (
        0.5 * xf * (1.0 + jnp.tanh(_SQRT_2_OVER_PI * (xf + 0.044715 * xf**3)))
    ).astype(x.dtype)


if __name__ == "__main__":
    # Small shape consistent with an elementwise activation module.
    x = jax.random.normal(jax.random.PRNGKey(0), (2, 4, 16, 16), dtype=jnp.float32)
    y = jax.block_until_ready(new_gelu(x))
    assert y.shape == x.shape and y.dtype == x.dtype
    assert jnp.allclose(y, _gelu_ref(x), atol=1e-5, rtol=1e-5)

    # Non-multiple-of-128 size: exercises tail pad + partial last block.
    x2 = jax.random.normal(jax.random.PRNGKey(1), (3, 7, 531), dtype=jnp.float32)
    y2 = jax.block_until_ready(new_gelu(x2))
    assert jnp.allclose(y2, _gelu_ref(x2), atol=1e-5, rtol=1e-5)

    # Medium f32 input: exercises the >=2-step split (dual-TC) path.
    x3 = jax.random.normal(jax.random.PRNGKey(2), (8, 128, 256), dtype=jnp.float32)
    y3 = jax.block_until_ready(new_gelu(x3))
    assert jnp.allclose(y3, _gelu_ref(x3), atol=1e-5, rtol=1e-5)

    # bf16 end-to-end: halves HBM traffic; kernel computes in f32 internally.
    x4 = jax.random.normal(jax.random.PRNGKey(3), (4, 8, 128), dtype=jnp.bfloat16)
    y4 = jax.block_until_ready(new_gelu(x4))
    assert y4.dtype == jnp.bfloat16
    assert jnp.allclose(y4.astype(jnp.float32), _gelu_ref(x4).astype(jnp.float32),
                        atol=2e-2, rtol=2e-2)

    print("KERNEL_OK")
</pallas_src>

<mosaic_0001>
module attributes {stable_mosaic.version = 11 : i64} {
  func.func @_gelu_kernel(%arg0: i32, %arg1: memref<16x128xf32, #tpu.memory_space<vmem>>, %arg2: memref<16x128xf32, #tpu.memory_space<vmem>>) attributes {dimension_semantics = [#tpu.dimension_semantics<parallel>], iteration_bounds = array<i64: 1>, scalar_prefetch = 0 : i64, scratch_operands = 0 : i64, tpu.core_type = #tpu.core_type<tc>, window_params = [{transform_indices = @transform_0, window_bounds = array<i64: 16, 128>}, {transform_indices = @transform_1, window_bounds = array<i64: 16, 128>}]} {
    %c0 = arith.constant 0 : index
    %c0_0 = arith.constant 0 : index
    %0 = vector.load %arg1[%c0, %c0_0] : memref<16x128xf32, #tpu.memory_space<vmem>>, vector<16x128xf32>
    %1 = arith.mulf %0, %0 : vector<16x128xf32>
    %cst = arith.constant 0.0356774069 : f32
    %2 = vector.broadcast %cst : f32 to vector<16x128xf32>
    %3 = arith.mulf %2, %1 : vector<16x128xf32>
    %cst_1 = arith.constant 0.797884583 : f32
    %4 = vector.broadcast %cst_1 : f32 to vector<16x128xf32>
    %5 = arith.addf %4, %3 : vector<16x128xf32>
    %6 = arith.mulf %0, %5 : vector<16x128xf32>
    %cst_2 = arith.constant 5.000000e-01 : f32
    %7 = vector.broadcast %cst_2 : f32 to vector<16x128xf32>
    %8 = arith.mulf %7, %0 : vector<16x128xf32>
    %9 = math.tanh %6 : vector<16x128xf32>
    %cst_3 = arith.constant 1.000000e+00 : f32
    %10 = vector.broadcast %cst_3 : f32 to vector<16x128xf32>
    %11 = arith.addf %10, %9 : vector<16x128xf32>
    %12 = arith.mulf %8, %11 : vector<16x128xf32>
    %c0_4 = arith.constant 0 : index
    %c0_5 = arith.constant 0 : index
    %13 = vector.load %arg2[%c0_4, %c0_5] : memref<16x128xf32, #tpu.memory_space<vmem>>, vector<16x128xf32>
    tpu.vector_store %arg2[%c0_4, %c0_5], %12 {strides = array<i32>} : memref<16x128xf32, #tpu.memory_space<vmem>>, vector<16x128xf32>,
    return
  }
  func.func @transform_0(%arg0: i32) -> (i32, i32) {
    %c0_i32 = arith.constant 0 : i32
    %c0_i32_0 = arith.constant 0 : i32
    return %arg0, %c0_i32 : i32, i32
  }
  func.func @transform_1(%arg0: i32) -> (i32, i32) {
    %c0_i32 = arith.constant 0 : i32
    %c0_i32_0 = arith.constant 0 : i32
    return %arg0, %c0_i32 : i32, i32
  }
}

</mosaic_0001>

<llo_original>
// kernel: tpu_custom_call.1
$region0: #{tpu_custom_call.1}
  #allocation0 [shape = 'u32[]', space=smem, size = 0x4, offset = 0x4, fixed_abs, tag = 'smem constant byte address 0x4 - core index']
  #allocation1 [shape = 'u32[144,128]{1,0:T(1,128)}', space=vmem, size = 0x12000, scoped, tag = 'internal scratch']
  %s0 = inlined_call_operand.hbm [shape: f32[16,128], index: 0, kind: input, shape index: {}]
  %s1 = inlined_call_operand.hbm [shape: f32[16,128], index: 1, kind: output, shape index: {}]
  %s2 = sld [smem:[#allocation0]]
  $region18: #{tpu_custom_call.1} parent=0
    _
  %s4 = ssub.s32 1, %s2
  %s5 = scalar_select 0, %s4, %s2
  $region1: #{tpu_custom_call.1} parent=0
    #allocation2 [shape = 'u8[8192]{0}', space=vmem, size = 0x2000, scoped, tag = 'input window, operand 0, single buffered']
    #allocation3 [shape = 's32[1]{0}', space=sflag, size = 0x4, scoped, tag = 'scoped memory for tpu_custom_call.1']
    #allocation4 [shape = 's32[1]{0}', space=sflag, size = 0x4, scoped, tag = 'scoped memory for tpu_custom_call.1']
    #allocation5 [shape = 'u8[8192]{0}', space=vmem, size = 0x2000, scoped, tag = 'output window, operand 0, single buffered']
    %6 = vsyncpa [#allocation3], 0
    %7 = vsyncpa [#allocation4], 0
    // Predicated region
    $region2: #{tpu_custom_call.1} parent=1 // pred_check
      _
    $region3: #{tpu_custom_call.1} parent=1 // pred_check_branch
      %9 = sbr.rel (0) target = $region5
    $region4: #{tpu_custom_call.1} parent=1 // pred_region
      %s11 = ssub.s32 256, 256
      %12 = vsyncadd [#allocation3], %s11
      %s13 = sshll.u32 [#allocation2], 4
      %s14 = int_to_ptr.vmem [resolvable:$true] %s13
      %19 = dma.hbm_to_vmem [thread:$0]  %s0, 256, %s14, [#allocation3], 128, 128, 8
    $region5: #{tpu_custom_call.1} parent=1 // pred_fallthru
      _
    // Predicated region
    $region6: #{tpu_custom_call.1} parent=1 // pred_check
      _
    $region7: #{tpu_custom_call.1} parent=1 // pred_check_branch
      %21 = sbr.rel (0) target = $region9
    $region8: #{tpu_custom_call.1} parent=1 // pred_region
      %22 = dma.done [#allocation3], 256
    $region9: #{tpu_custom_call.1} parent=1 // pred_fallthru
      _
    %v23 = vld [vmem:[#allocation2] sm:$0xff]
    %v24 = vld [vmem:[#allocation2 + $0x8] sm:$0xff]
    %v25 = vmul.f32 %v23, %v23
    %v26 = vmul.f32 %v24, %v24
    %v27 = vmul.f32 %v25, 0.035677407
    %v28 = vmul.f32 %v26, 0.035677407
    %v29 = vadd.f32 %v27, 0.7978846
    %v30 = vadd.f32 %v28, 0.7978846
    %v31 = vmul.f32 %v23, %v29
    %v32 = vmul.f32 %v24, %v30
    %v33 = vmul.f32 %v23, 0.5
    %v34 = vmul.f32 %v24, 0.5
    %v35 = vtanh.pop %v31
    %v36 = vtanh.pop %v32
    %v37 = vadd.f32 %v35, 1.0
    %v38 = vadd.f32 %v36, 1.0
    %v39 = vmul.f32 %v33, %v37
    %v40 = vmul.f32 %v34, %v38
    %41 = vst [vmem:[#allocation5] sm:$0xff] %v39
    %42 = vst [vmem:[#allocation5 + $0x8] sm:$0xff] %v40
    // Predicated region
    $region10: #{tpu_custom_call.1} parent=1 // pred_check
      _
    $region11: #{tpu_custom_call.1} parent=1 // pred_check_branch
      %44 = sbr.rel (0) target = $region13
    $region12: #{tpu_custom_call.1} parent=1 // pred_region
      %s46 = ssub.s32 256, 256
      %47 = vsyncadd [#allocation4], %s46
      %s48 = sshll.u32 [#allocation5], 4
      %s49 = int_to_ptr.vmem [resolvable:$true] %s48
      %54 = dma.vmem_to_hbm [thread:$0]  %s49, 256, %s1, [#allocation4], 128, 128, 8
    $region13: #{tpu_custom_call.1} parent=1 // pred_fallthru
      _
    // Predicated region
    $region14: #{tpu_custom_call.1} parent=1 // pred_check
      _
    $region15: #{tpu_custom_call.1} parent=1 // pred_check_branch
      %56 = sbr.rel (0) target = $region17
    $region16: #{tpu_custom_call.1} parent=1 // pred_region
      %57 = dma.done [#allocation4], 256
    $region17: #{tpu_custom_call.1} parent=1 // pred_fallthru
      _
    %58 = vsyncpa [#allocation3], 1
    %59 = vsyncpa [#allocation4], 1

</llo_original>
